<compile_context>
chip_gen: v7x
topology: tpu7x:2x2x1
jax: 0.10.0
libtpu: 0.0.40
codegen_flags: <defaults>
</compile_context>

<pallas_src>
import functools

import jax
import jax.numpy as jnp
import numpy as np
from jax.experimental import pallas as pl
from jax.experimental.pallas import tpu as pltpu


def _round_up(x, m):
    return ((x + m - 1) // m) * m


# ----------------------------------------------------------------------------- #
# Pallas kernel
# ----------------------------------------------------------------------------- #
def _adapt_kernel(params_ref, img_ref, out_ref, *, num_seg, num_transforms):
    """One grid step: all J transforms applied to one (tile_r, 128) image tile.

    params_ref : SMEM f32[J * (3*num_seg + 2)] (scalar-prefetched), per j:
        per segment i:
            [3*i + 0] = base_hu + hu_low_i          (threshold)
            [3*i + 1] = k_i                          (slope)
            [3*i + 2] = norm_low_i - k_i * hu_low_i  (folded intercept)
        tail:
            [3*num_seg + 0] = base_hu + last hu_high
            [3*num_seg + 1] = last norm_high + base_norm
    img_ref : VMEM f32[tile_r, 128]
    out_ref : VMEM out_dtype[J, tile_r, 128]
    """
    x = img_ref[...]
    stride = 3 * num_seg + 2
    # Thresholds are non-decreasing, so a ">=" compare + select chain (later
    # selects overwrite earlier ones) reproduces the reference's two-sided
    # masks, including degenerate zero-width segments whose inf/nan values are
    # always overwritten by the next select.
    for j in range(num_transforms):
        base = j * stride
        cur = jnp.zeros_like(x)
        for i in range(num_seg):
            thr = params_ref[base + 3 * i + 0]
            k = params_ref[base + 3 * i + 1]
            b = params_ref[base + 3 * i + 2]
            cur = jnp.where(x >= thr, k * x + b, cur)
        thr_last = params_ref[base + 3 * num_seg + 0]
        val_last = params_ref[base + 3 * num_seg + 1]
        cur = jnp.where(x >= thr_last, val_last, cur)
        out_ref[j] = cur.astype(out_ref.dtype)


# ----------------------------------------------------------------------------- #
# Wrapper (parameter folding, tiling, layout glue)
# ----------------------------------------------------------------------------- #
def adapt_transform(img, hu_lis, norm_lis, base_hu=-2000.0, base_norm=0.0,
                    *, out_dtype=jnp.float32):
    """img: f32[N, C, H, W]; hu_lis, norm_lis: f32[J, L].  Returns [N, J*C, H, W]."""
    N, C, H, W = img.shape
    J, L = hu_lis.shape
    assert L >= 2, "need at least one segment (L >= 2)"
    num_seg = L - 1
    S = C * H * W

    # ---- fold per-(j, i) scalar constants (thr, k, b) in plain JAX (tiny) ----
    hu = jnp.abs(100.0 * hu_lis.astype(jnp.float32))
    nm = jnp.abs(norm_lis.astype(jnp.float32))
    # Prefix sums built with the same jnp.sum-over-prefix as the reference so
    # thresholds are bit-identical (no boundary-pixel flips).
    cum_hu = jnp.stack([jnp.sum(hu[:, :i], axis=1) for i in range(1, L + 1)], axis=1)
    cum_nm = jnp.stack([jnp.sum(nm[:, :i], axis=1) for i in range(1, L + 1)], axis=1)
    hu_low, hu_high = cum_hu[:, :-1], cum_hu[:, 1:]
    nm_low, nm_high = cum_nm[:, :-1], cum_nm[:, 1:]
    # Zero-width segments give inf/nan like the reference; never selected.
    k = (nm_high - nm_low) / (hu_high - hu_low)
    b = nm_low - k * hu_low                      # folded intercept (~1 ulp vs ref)
    thr = base_hu + hu_low
    seg = jnp.stack([thr, k, b], axis=-1).reshape(J, 3 * num_seg)
    tail = jnp.stack([base_hu + hu_high[:, -1],
                      nm_high[:, -1] + base_norm], axis=-1)            # [J, 2]
    params = jnp.concatenate([seg, tail], axis=-1).reshape(-1).astype(jnp.float32)

    # ---- sublane/lane-dense 2-D view: (N, R, 128) -----------------------------
    S128 = _round_up(S, 128)
    R = S128 // 128
    imgf = img.astype(jnp.float32).reshape(N, S)
    if S128 != S:
        imgf = jnp.pad(imgf, ((0, 0), (0, S128 - S)))
    imgf = imgf.reshape(N, R, 128)

    out_itemsize = int(np.dtype(out_dtype).itemsize)

    # ---- tile sizing from per-chip VMEM capacity ------------------------------
    try:
        vmem_cap = int(pltpu.get_tpu_info().vmem_capacity_bytes)
    except Exception:
        vmem_cap = 64 * 1024 * 1024                 # conservative (v7x per-core)
    pipeline_budget = min(vmem_cap // 2, 48 * 1024 * 1024)   # double-buffered blocks
    bytes_per_row = 128 * (4 + J * out_itemsize)              # 1 input row + J output rows
    rows_budget = max(16, (pipeline_budget // (2 * bytes_per_row)) // 16 * 16)
    tile_r = R if rows_budget >= R else rows_budget
    grid_r = pl.cdiv(R, tile_r)
    # Give megacore parts (v7x, 2 TCs) at least 2 parallel grid points if possible.
    if N * grid_r < 2 and R > 16:
        tile_r = min(R, _round_up(pl.cdiv(R, 2), 16))
        grid_r = pl.cdiv(R, tile_r)
    vmem_limit = int(min(vmem_cap, pipeline_budget + 16 * 1024 * 1024))

    kernel = functools.partial(_adapt_kernel, num_seg=num_seg, num_transforms=J)
    cost = pl.CostEstimate(
        flops=int(N * J * S128 * (4 * num_seg + 2)),
        transcendentals=0,
        bytes_accessed=int(N * S128 * 4 + N * J * S128 * out_itemsize
                           + J * (3 * num_seg + 2) * 4),
    )

    out = pl.pallas_call(
        kernel,
        out_shape=jax.ShapeDtypeStruct((N, J, R, 128), out_dtype),
        grid_spec=pltpu.PrefetchScalarGridSpec(
            num_scalar_prefetch=1,                        # params -> SMEM
            grid=(N, grid_r),
            in_specs=[
                pl.BlockSpec((None, tile_r, 128), lambda n, r, p: (n, r, 0)),
            ],
            out_specs=pl.BlockSpec((None, J, tile_r, 128),
                                   lambda n, r, p: (n, 0, r, 0)),
        ),
        compiler_params=pltpu.CompilerParams(
            dimension_semantics=("parallel", "parallel"),
            vmem_limit_bytes=vmem_limit,
        ),
        cost_estimate=cost,
    )(params, imgf)

    flat = out.reshape(N, J, S128)
    if S128 != S:
        # TODO(synk): trailing slice re-copies the output; only hit when
        # C*H*W is not a multiple of 128 (rare for real CT shapes).
        flat = flat[..., :S]
    # (N, J, C*H*W) -> (N, J*C, H, W): free view, identical to torch.cat(dim=1).
    return flat.reshape(N, J * C, H, W)


# ----------------------------------------------------------------------------- #
# Pure-JAX reference (mirrors the PyTorch forward line by line)
# ----------------------------------------------------------------------------- #
def adapt_transform_ref(img, hu_lis, norm_lis, base_hu=-2000.0, base_norm=0.0):
    J, L = hu_lis.shape
    outs = []
    for j in range(J):
        cur = jnp.zeros_like(img)
        for i in range(1, L):
            hu_high = jnp.sum(jnp.abs(100.0 * hu_lis[j, : i + 1]))
            hu_low = jnp.sum(jnp.abs(100.0 * hu_lis[j, :i]))
            norm_high = jnp.sum(jnp.abs(norm_lis[j, : i + 1]))
            norm_low = jnp.sum(jnp.abs(norm_lis[j, :i]))
            mask = (img < base_hu + hu_high) & (img >= base_hu + hu_low)
            kk = (norm_high - norm_low) / (hu_high - hu_low)
            cur = jnp.where(mask, kk * (img - hu_low) + norm_low, cur)
        cur = jnp.where(img >= base_hu + hu_high, norm_high + base_norm, cur)
        outs.append(cur)
    return jnp.concatenate(outs, axis=1)


# ----------------------------------------------------------------------------- #
if __name__ == "__main__":
    key = jax.random.PRNGKey(0)

    # Small shapes: batch=2, channels=4, spatial=16x16; J=2 transforms, L=4 knots.
    N, C, H, W = 2, 4, 16, 16
    base_hu, base_norm = -2000.0, 0.0

    hu_lis = jnp.array([[0.5, 2.0, 4.0, 6.0],
                        [1.0, 3.0, 2.0, 5.0]], dtype=jnp.float32)
    norm_lis = jnp.array([[0.00, 0.30, 0.30, 0.40],
                          [0.10, 0.20, 0.50, 0.20]], dtype=jnp.float32)

    # Input HU values spanning all the piecewise segments around base_hu.
    img = jax.random.uniform(key, (N, C, H, W), dtype=jnp.float32,
                             minval=-2100.0, maxval=-500.0)

    out = jax.block_until_ready(
        adapt_transform(img, hu_lis, norm_lis, base_hu, base_norm))
    ref = adapt_transform_ref(img, hu_lis, norm_lis, base_hu, base_norm)
    assert out.shape == (N, hu_lis.shape[0] * C, H, W), out.shape
    assert jnp.allclose(out, ref, atol=1e-5, rtol=1e-5), "f32 mismatch vs reference"

    # Optional bf16 output path (halves the dominant Jx HBM write stream).
    out_bf16 = jax.block_until_ready(
        adapt_transform(img, hu_lis, norm_lis, base_hu, base_norm,
                        out_dtype=jnp.bfloat16))
    assert out_bf16.shape == out.shape
    assert float(jnp.max(jnp.abs(out_bf16.astype(jnp.float32) - ref))) < 5e-2, \
        "bf16 mismatch vs reference"

    print("KERNEL_OK")
</pallas_src>

<mosaic_0001>
module attributes {stable_mosaic.version = 11 : i64} {
  func.func @_adapt_kernel(%arg0: i32, %arg1: i32, %arg2: memref<22xf32, #tpu.memory_space<smem>>, %arg3: memref<1x8x128xf32, #tpu.memory_space<vmem>>, %arg4: memref<1x2x8x128xf32, #tpu.memory_space<vmem>>) attributes {dimension_semantics = [#tpu.dimension_semantics<parallel>, #tpu.dimension_semantics<parallel>], iteration_bounds = array<i64: 2, 1>, scalar_prefetch = 1 : i64, scratch_operands = 0 : i64, tpu.core_type = #tpu.core_type<tc>, window_params = [{transform_indices = @transform_0, window_bounds = array<i64: 1, 8, 128>}, {transform_indices = @transform_1, window_bounds = array<i64: 1, 2, 8, 128>}]} {
    %c0 = arith.constant 0 : index
    %c0_0 = arith.constant 0 : index
    %c0_1 = arith.constant 0 : index
    %0 = vector.load %arg3[%c0, %c0_0, %c0_1] : memref<1x8x128xf32, #tpu.memory_space<vmem>>, vector<1x8x128xf32>
    %1 = vector.shape_cast %0 : vector<1x8x128xf32> to vector<8x128xf32>
    %cst = arith.constant 0.000000e+00 : f32
    %2 = vector.broadcast %cst : f32 to vector<8x128xf32>
    %c0_2 = arith.constant 0 : index
    %3 = memref.load %arg2[%c0_2] : memref<22xf32, #tpu.memory_space<smem>>
    %c1 = arith.constant 1 : index
    %4 = memref.load %arg2[%c1] : memref<22xf32, #tpu.memory_space<smem>>
    %c2 = arith.constant 2 : index
    %5 = memref.load %arg2[%c2] : memref<22xf32, #tpu.memory_space<smem>>
    %6 = vector.broadcast %3 : f32 to vector<8x128xf32>
    %7 = arith.cmpf oge, %1, %6 : vector<8x128xf32>
    %8 = vector.broadcast %4 : f32 to vector<8x128xf32>
    %9 = arith.mulf %8, %1 : vector<8x128xf32>
    %10 = vector.broadcast %5 : f32 to vector<8x128xf32>
    %11 = arith.addf %9, %10 : vector<8x128xf32>
    %12 = arith.select %7, %11, %2 : vector<8x128xi1>, vector<8x128xf32>
    %c3 = arith.constant 3 : index
    %13 = memref.load %arg2[%c3] : memref<22xf32, #tpu.memory_space<smem>>
    %c4 = arith.constant 4 : index
    %14 = memref.load %arg2[%c4] : memref<22xf32, #tpu.memory_space<smem>>
    %c5 = arith.constant 5 : index
    %15 = memref.load %arg2[%c5] : memref<22xf32, #tpu.memory_space<smem>>
    %16 = vector.broadcast %13 : f32 to vector<8x128xf32>
    %17 = arith.cmpf oge, %1, %16 : vector<8x128xf32>
    %18 = vector.broadcast %14 : f32 to vector<8x128xf32>
    %19 = arith.mulf %18, %1 : vector<8x128xf32>
    %20 = vector.broadcast %15 : f32 to vector<8x128xf32>
    %21 = arith.addf %19, %20 : vector<8x128xf32>
    %22 = arith.select %17, %21, %12 : vector<8x128xi1>, vector<8x128xf32>
    %c6 = arith.constant 6 : index
    %23 = memref.load %arg2[%c6] : memref<22xf32, #tpu.memory_space<smem>>
    %c7 = arith.constant 7 : index
    %24 = memref.load %arg2[%c7] : memref<22xf32, #tpu.memory_space<smem>>
    %c8 = arith.constant 8 : index
    %25 = memref.load %arg2[%c8] : memref<22xf32, #tpu.memory_space<smem>>
    %26 = vector.broadcast %23 : f32 to vector<8x128xf32>
    %27 = arith.cmpf oge, %1, %26 : vector<8x128xf32>
    %28 = vector.broadcast %24 : f32 to vector<8x128xf32>
    %29 = arith.mulf %28, %1 : vector<8x128xf32>
    %30 = vector.broadcast %25 : f32 to vector<8x128xf32>
    %31 = arith.addf %29, %30 : vector<8x128xf32>
    %32 = arith.select %27, %31, %22 : vector<8x128xi1>, vector<8x128xf32>
    %c9 = arith.constant 9 : index
    %33 = memref.load %arg2[%c9] : memref<22xf32, #tpu.memory_space<smem>>
    %c10 = arith.constant 10 : index
    %34 = memref.load %arg2[%c10] : memref<22xf32, #tpu.memory_space<smem>>
    %35 = vector.broadcast %33 : f32 to vector<8x128xf32>
    %36 = arith.cmpf oge, %1, %35 : vector<8x128xf32>
    %37 = vector.broadcast %34 : f32 to vector<8x128xf32>
    %38 = arith.select %36, %37, %32 : vector<8x128xi1>, vector<8x128xf32>
    %c0_3 = arith.constant 0 : index
    %c0_4 = arith.constant 0 : index
    %c0_5 = arith.constant 0 : index
    %c0_6 = arith.constant 0 : index
    %39 = vector.load %arg4[%c0_3, %c0_4, %c0_5, %c0_6] : memref<1x2x8x128xf32, #tpu.memory_space<vmem>>, vector<1x1x8x128xf32>
    %40 = vector.shape_cast %39 : vector<1x1x8x128xf32> to vector<8x128xf32>
    %41 = vector.shape_cast %38 : vector<8x128xf32> to vector<1x1x8x128xf32>
    tpu.vector_store %arg4[%c0_3, %c0_4, %c0_5, %c0_6], %41 {strides = array<i32>} : memref<1x2x8x128xf32, #tpu.memory_space<vmem>>, vector<1x1x8x128xf32>,
    %cst_7 = arith.constant 0.000000e+00 : f32
    %42 = vector.broadcast %cst_7 : f32 to vector<8x128xf32>
    %c11 = arith.constant 11 : index
    %43 = memref.load %arg2[%c11] : memref<22xf32, #tpu.memory_space<smem>>
    %c12 = arith.constant 12 : index
    %44 = memref.load %arg2[%c12] : memref<22xf32, #tpu.memory_space<smem>>
    %c13 = arith.constant 13 : index
    %45 = memref.load %arg2[%c13] : memref<22xf32, #tpu.memory_space<smem>>
    %46 = vector.broadcast %43 : f32 to vector<8x128xf32>
    %47 = arith.cmpf oge, %1, %46 : vector<8x128xf32>
    %48 = vector.broadcast %44 : f32 to vector<8x128xf32>
    %49 = arith.mulf %48, %1 : vector<8x128xf32>
    %50 = vector.broadcast %45 : f32 to vector<8x128xf32>
    %51 = arith.addf %49, %50 : vector<8x128xf32>
    %52 = arith.select %47, %51, %42 : vector<8x128xi1>, vector<8x128xf32>
    %c14 = arith.constant 14 : index
    %53 = memref.load %arg2[%c14] : memref<22xf32, #tpu.memory_space<smem>>
    %c15 = arith.constant 15 : index
    %54 = memref.load %arg2[%c15] : memref<22xf32, #tpu.memory_space<smem>>
    %c16 = arith.constant 16 : index
    %55 = memref.load %arg2[%c16] : memref<22xf32, #tpu.memory_space<smem>>
    %56 = vector.broadcast %53 : f32 to vector<8x128xf32>
    %57 = arith.cmpf oge, %1, %56 : vector<8x128xf32>
    %58 = vector.broadcast %54 : f32 to vector<8x128xf32>
    %59 = arith.mulf %58, %1 : vector<8x128xf32>
    %60 = vector.broadcast %55 : f32 to vector<8x128xf32>
    %61 = arith.addf %59, %60 : vector<8x128xf32>
    %62 = arith.select %57, %61, %52 : vector<8x128xi1>, vector<8x128xf32>
    %c17 = arith.constant 17 : index
    %63 = memref.load %arg2[%c17] : memref<22xf32, #tpu.memory_space<smem>>
    %c18 = arith.constant 18 : index
    %64 = memref.load %arg2[%c18] : memref<22xf32, #tpu.memory_space<smem>>
    %c19 = arith.constant 19 : index
    %65 = memref.load %arg2[%c19] : memref<22xf32, #tpu.memory_space<smem>>
    %66 = vector.broadcast %63 : f32 to vector<8x128xf32>
    %67 = arith.cmpf oge, %1, %66 : vector<8x128xf32>
    %68 = vector.broadcast %64 : f32 to vector<8x128xf32>
    %69 = arith.mulf %68, %1 : vector<8x128xf32>
    %70 = vector.broadcast %65 : f32 to vector<8x128xf32>
    %71 = arith.addf %69, %70 : vector<8x128xf32>
    %72 = arith.select %67, %71, %62 : vector<8x128xi1>, vector<8x128xf32>
    %c20 = arith.constant 20 : index
    %73 = memref.load %arg2[%c20] : memref<22xf32, #tpu.memory_space<smem>>
    %c21 = arith.constant 21 : index
    %74 = memref.load %arg2[%c21] : memref<22xf32, #tpu.memory_space<smem>>
    %75 = vector.broadcast %73 : f32 to vector<8x128xf32>
    %76 = arith.cmpf oge, %1, %75 : vector<8x128xf32>
    %77 = vector.broadcast %74 : f32 to vector<8x128xf32>
    %78 = arith.select %76, %77, %72 : vector<8x128xi1>, vector<8x128xf32>
    %c0_8 = arith.constant 0 : index
    %c1_9 = arith.constant 1 : index
    %c0_10 = arith.constant 0 : index
    %c0_11 = arith.constant 0 : index
    %79 = vector.load %arg4[%c0_8, %c1_9, %c0_10, %c0_11] : memref<1x2x8x128xf32, #tpu.memory_space<vmem>>, vector<1x1x8x128xf32>
    %80 = vector.shape_cast %79 : vector<1x1x8x128xf32> to vector<8x128xf32>
    %81 = vector.shape_cast %78 : vector<8x128xf32> to vector<1x1x8x128xf32>
    tpu.vector_store %arg4[%c0_8, %c1_9, %c0_10, %c0_11], %81 {strides = array<i32>} : memref<1x2x8x128xf32, #tpu.memory_space<vmem>>, vector<1x1x8x128xf32>,
    return
  }
  func.func @transform_0(%arg0: i32, %arg1: i32, %arg2: memref<22xf32, #tpu.memory_space<smem>>) -> (i32, i32, i32) {
    %c0_i32 = arith.constant 0 : i32
    %c0_i32_0 = arith.constant 0 : i32
    return %arg0, %arg1, %c0_i32 : i32, i32, i32
  }
  func.func @transform_1(%arg0: i32, %arg1: i32, %arg2: memref<22xf32, #tpu.memory_space<smem>>) -> (i32, i32, i32, i32) {
    %c0_i32 = arith.constant 0 : i32
    %c0_i32_0 = arith.constant 0 : i32
    %c0_i32_1 = arith.constant 0 : i32
    return %arg0, %c0_i32, %arg1, %c0_i32_0 : i32, i32, i32, i32
  }
}

</mosaic_0001>

<llo_original>
// kernel: tpu_custom_call.1
$region0: #{tpu_custom_call.1}
  #allocation0 [shape = 'u32[]', space=smem, size = 0x4, offset = 0x4, fixed_abs, tag = 'smem constant byte address 0x4 - core index']
  #allocation1 [shape = 'u32[144,128]{1,0:T(1,128)}', space=vmem, size = 0x12000, scoped, tag = 'internal scratch']
  #allocation2 [shape = 's32[1]{0}', space=sflag, size = 0x4, scoped, tag = 'scoped memory for tpu_custom_call.1']
  #allocation3 [shape = 'u8[512]{0}', space=smem, size = 0x200, scoped, tag = 'prefetched SMEM operand 0']
  %s0 = inlined_call_operand.hbm [shape: f32[22], index: 0, kind: input, shape index: {}]
  %s1 = inlined_call_operand.hbm [shape: f32[2,8,128], index: 1, kind: input, shape index: {}]
  %s2 = inlined_call_operand.hbm [shape: f32[2,2,8,128], index: 2, kind: output, shape index: {}]
  %s3 = sld [smem:[#allocation0]]
  $region41: #{tpu_custom_call.1} parent=0
    _
  %s5 = ssub.s32 1, %s3
  %s6 = scalar_select 0, %s5, %s3
  %8 = dma.hbm_to_smem %s0, 16, [#allocation3], [#allocation2]
  %9 = dma.done [#allocation2], 16
  %10 = sfence
  $region1: #{tpu_custom_call.1} parent=0
    #allocation4 [shape = 'u8[8192]{0}', space=vmem, size = 0x2000, scoped, tag = 'input window, operand 1']
    #allocation5 [shape = 's32[2]{0}', space=sflag, size = 0x8, scoped, tag = 'scoped memory for tpu_custom_call.1']
    #allocation6 [shape = 's32[2]{0}', space=sflag, size = 0x8, scoped, tag = 'scoped memory for tpu_custom_call.1']
    #allocation7 [shape = 'u8[16384]{0}', space=vmem, size = 0x4000, scoped, tag = 'output window, operand 0']
    %11 = vsyncpa [#allocation5], 0
    %s12 = scalar_lea.sflag [#allocation5], 1
    %13 = vsyncpa %s12, 0
    %14 = vsyncpa [#allocation6], 0
    %s15 = scalar_lea.sflag [#allocation6], 1
    %16 = vsyncpa %s15, 0
    loop: start=0, step=1, limit=4
    $region2: #{tpu_custom_call.1} parent=1 // loop_pre_header
      _
    $region3: #{tpu_custom_call.1} parent=1 // loop_header
      %s18 = sphi 0, %s22
      %p19 = scmp.ge.s32.totalorder %s18, 4
      %s25 = sphi 0, %s37
      %s26 = sphi 0, %s33
      %s27 = sphi 0, %s25
      %s28 = sphi 0, %s26
      %s29 = sphi 0, %s27
      %s30 = sphi 0, %s28
      %s42 = sphi 0, %s44
      %s45 = sphi 0, %s42
      %s46 = sphi 0, %s45
      %s62 = sphi 0, %s46
      %s70 = sphi 0, %s72
      %s73 = sphi 0, %s70
      %s74 = sphi 0, %s73
      %s90 = sphi 0, %s74
    $region4: #{tpu_custom_call.1} parent=1 // loop_header_branch
      %21 = sbr.rel (%p19) target = $region8
    $region5: #{tpu_custom_call.1} parent=1 // loop_body
      %s23 = ssub.s32 %s18, 1
      %s24 = ssub.s32 %s18, 2
      %s31 = sadd.s32 1, %s26
      %p32 = scmp.ge.s32.totalorder %s31, 1
      %s33 = scalar_select %p32, 0, %s31
      %s34 = sadd.s32 1, %s25
      %s35 = scalar_select %p32, %s34, %s25
      %p36 = scmp.ge.s32.totalorder %s35, 2
      %s37 = scalar_select %p36, 0, %s35
      %s38 = ssub.s32 %s25, %s37
      %s39 = ssub.s32 %s26, %s33
      %s40 = sor.u32 %s38, %s39
      %p41 = scmp.eq.s32.totalorder %s40, 0
      %s43 = sadd.s32 %s42, 1
      %s44 = scalar_select %p41, %s42, %s43
      %p47 = pneg %p41
      %p48 = scmp.eq.s32.totalorder %s18, 1
      %p49 = por %p47, %p48
      %p50 = scmp.ne.s32.totalorder %s42, %s45
      %p51 = scmp.eq.s32.totalorder %s18, 0
      %p52 = por %p50, %p51
      %p53 = scmp.ne.s32.totalorder %s42, %s45
      %p54 = scmp.eq.s32.totalorder %s23, 1
      %p55 = por %p53, %p54
      %p56 = scmp.ne.s32.totalorder %s45, %s46
      %p57 = scmp.eq.s32.totalorder %s23, 0
      %p58 = por %p56, %p57
      %p59 = scmp.ne.s32.totalorder %s45, %s46
      %p60 = scmp.eq.s32.totalorder %s24, 1
      %p61 = por %p59, %p60
      %p63 = scmp.ne.s32.totalorder %s46, %s62
      %p64 = scmp.eq.s32.totalorder %s24, 0
      %p65 = por %p63, %p64
      %s66 = ssub.s32 %s25, %s37
      %s67 = ssub.s32 %s26, %s33
      %s68 = sor.u32 %s66, %s67
      %p69 = scmp.eq.s32.totalorder %s68, 0
      %s71 = sadd.s32 %s70, 1
      %s72 = scalar_select %p69, %s70, %s71
      %p75 = pneg %p69
      %p76 = scmp.eq.s32.totalorder %s18, 1
      %p77 = por %p75, %p76
      %p78 = scmp.ne.s32.totalorder %s70, %s73
      %p79 = scmp.eq.s32.totalorder %s18, 0
      %p80 = por %p78, %p79
      %p81 = scmp.ne.s32.totalorder %s70, %s73
      %p82 = scmp.eq.s32.totalorder %s23, 1
      %p83 = por %p81, %p82
      %p84 = scmp.ne.s32.totalorder %s73, %s74
      %p85 = scmp.eq.s32.totalorder %s23, 0
      %p86 = por %p84, %p85
      %p87 = scmp.ne.s32.totalorder %s73, %s74
      %p88 = scmp.eq.s32.totalorder %s24, 1
      %p89 = por %p87, %p88
      %p91 = scmp.ne.s32.totalorder %s74, %s90
      %p92 = scmp.eq.s32.totalorder %s24, 0
      %p93 = por %p91, %p92
      %p94 = scmp.le.s32.totalorder 1, %s18
      %p95 = scmp.lt.s32.totalorder %s18, 3
      %p96 = pnand %p94, %p95
      %p97 = pneg %p96
      // Predicated region
      $region9: #{tpu_custom_call.1} parent=5 // pred_check
        _
      $region10: #{tpu_custom_call.1} parent=5 // pred_check_branch
        %99 = sbr.rel (%p96) target = $region12
      $region11: #{tpu_custom_call.1} parent=5 // pred_region
        %s100 = ssub.s32 %s18, 1
      $region12: #{tpu_custom_call.1} parent=5 // pred_fallthru
        _
      %p101 = scmp.lt.s32.totalorder %s18, 2
      // Predicated region
      $region13: #{tpu_custom_call.1} parent=5 // pred_check
        %p102 = pneg %p101
      $region14: #{tpu_custom_call.1} parent=5 // pred_check_branch
        %104 = sbr.rel (%p102) target = $region16
      $region15: #{tpu_custom_call.1} parent=5 // pred_region
        // Predicated region
        $region17: #{tpu_custom_call.1} parent=15 // pred_check
          %p105 = pneg %p52
        $region18: #{tpu_custom_call.1} parent=15 // pred_check_branch
          %107 = sbr.rel (%p105) target = $region20
        $region19: #{tpu_custom_call.1} parent=15 // pred_region
          %s108 = sand.u32 %s42, 1
          %s109 = scalar_lea.sflag [#allocation5], %s108
          %s110 = sand.u32 %s42, 1
          %s111 = smul.addr %s110, 8
          %s112 = scalar_lea.vmem [#allocation4], %s111
          %s114 = ssub.s32 128, 128
          %115 = vsyncadd %s109, %s114
          %s116 = sadd.s32 %s26, %s25
          %s117 = smul.addr %s116, 128
          %s118 = scalar_lea.hbm %s1, %s117
          %s120 = sshll.u32 %s112, 4
          %s121 = int_to_ptr.vmem [resolvable:$true] %s120
          %123 = dma.hbm_to_vmem [thread:$0]  %s118, 128, %s121, %s109
        $region20: #{tpu_custom_call.1} parent=15 // pred_fallthru
          _
      $region16: #{tpu_custom_call.1} parent=5 // pred_fallthru
        _
      %p124 = scmp.le.s32.totalorder 1, %s18
      %p125 = scmp.lt.s32.totalorder %s18, 3
      %p126 = pnand %p124, %p125
      %p127 = pneg %p126
      // Predicated region
      $region21: #{tpu_custom_call.1} parent=5 // pred_check
        _
      $region22: #{tpu_custom_call.1} parent=5 // pred_check_branch
        %129 = sbr.rel (%p126) target = $region24
      $region23: #{tpu_custom_call.1} parent=5 // pred_region
        %s130 = ssub.s32 %s18, 1
        %s131 = sand.u32 %s45, 1
        %s132 = scalar_lea.sflag [#allocation5], %s131
        %s133 = sand.u32 %s45, 1
        %s134 = smul.addr %s133, 8
        %s135 = scalar_lea.vmem [#allocation4], %s134
        // Predicated region
        $region25: #{tpu_custom_call.1} parent=23 // pred_check
          %p136 = pneg %p58
        $region26: #{tpu_custom_call.1} parent=23 // pred_check_branch
          %138 = sbr.rel (%p136) target = $region28
        $region27: #{tpu_custom_call.1} parent=23 // pred_region
          %139 = dma.done %s132, 128
        $region28: #{tpu_custom_call.1} parent=23 // pred_fallthru
          _
        %s140 = sand.u32 %s45, 1
        %s141 = scalar_lea.sflag [#allocation5], %s140
        %s142 = sand.u32 %s45, 1
        %s143 = smul.addr %s142, 8
        %s144 = scalar_lea.vmem [#allocation4], %s143
        %p145 = pneg %p58
        %p146 = pneg %p55
        %p147 = pneg %p86
        %p148 = pneg %p83
        %s149 = sand.u32 %s73, 1
        %s150 = scalar_lea.sflag [#allocation6], %s149
        %s151 = sand.u32 %s73, 1
        %s152 = smul.addr %s151, 16
        %s153 = scalar_lea.vmem [#allocation7], %s152
        %v154 = vld [vmem:[%s135] sm:$0xff]
        %s155 = sld [smem:[#allocation3]]
        %s156 = sld [smem:[#allocation3 + $0x1]]
        %s157 = sld [smem:[#allocation3 + $0x2]]
        %v158 = vstv %s155
        %vm159 = vcmp.ge.f32.partialorder %v154, %v158
        %v160 = vstv %s156
        %v161 = vmul.f32 %v160, %v154
        %v162 = vstv %s157
        %v163 = vadd.f32 %v161, %v162
        %v164 = vsel %vm159, %v163, 0.0
        %s165 = sld [smem:[#allocation3 + $0x3]]
        %s166 = sld [smem:[#allocation3 + $0x4]]
        %s167 = sld [smem:[#allocation3 + $0x5]]
        %v168 = vstv %s165
        %vm169 = vcmp.ge.f32.partialorder %v154, %v168
        %v170 = vstv %s166
        %v171 = vmul.f32 %v170, %v154
        %v172 = vstv %s167
        %v173 = vadd.f32 %v171, %v172
        %v174 = vsel %vm169, %v173, %v164
        %s175 = sld [smem:[#allocation3 + $0x6]]
        %s176 = sld [smem:[#allocation3 + $0x7]]
        %s177 = sld [smem:[#allocation3 + $0x8]]
        %v178 = vstv %s175
        %vm179 = vcmp.ge.f32.partialorder %v154, %v178
        %v180 = vstv %s176
        %v181 = vmul.f32 %v180, %v154
        %v182 = vstv %s177
        %v183 = vadd.f32 %v181, %v182
        %v184 = vsel %vm179, %v183, %v174
        %s185 = sld [smem:[#allocation3 + $0x9]]
        %s186 = sld [smem:[#allocation3 + $0xa]]
        %v187 = vstv %s185
        %vm188 = vcmp.ge.f32.partialorder %v154, %v187
        %v189 = vstv %s186
        %v190 = vsel %vm188, %v189, %v184
        %191 = vst [vmem:[%s153] sm:$0xff] %v190
        %s192 = sld [smem:[#allocation3 + $0xb]]
        %s193 = sld [smem:[#allocation3 + $0xc]]
        %s194 = sld [smem:[#allocation3 + $0xd]]
        %v195 = vstv %s192
        %vm196 = vcmp.ge.f32.partialorder %v154, %v195
        %v197 = vstv %s193
        %v198 = vmul.f32 %v197, %v154
        %v199 = vstv %s194
        %v200 = vadd.f32 %v198, %v199
        %v201 = vsel %vm196, %v200, 0.0
        %s202 = sld [smem:[#allocation3 + $0xe]]
        %s203 = sld [smem:[#allocation3 + $0xf]]
        %s204 = sld [smem:[#allocation3 + $0x10]]
        %v205 = vstv %s202
        %vm206 = vcmp.ge.f32.partialorder %v154, %v205
        %v207 = vstv %s203
        %v208 = vmul.f32 %v207, %v154
        %v209 = vstv %s204
        %v210 = vadd.f32 %v208, %v209
        %v211 = vsel %vm206, %v210, %v201
        %s212 = sld [smem:[#allocation3 + $0x11]]
        %s213 = sld [smem:[#allocation3 + $0x12]]
        %s214 = sld [smem:[#allocation3 + $0x13]]
        %v215 = vstv %s212
        %vm216 = vcmp.ge.f32.partialorder %v154, %v215
        %v217 = vstv %s213
        %v218 = vmul.f32 %v217, %v154
        %v219 = vstv %s214
        %v220 = vadd.f32 %v218, %v219
        %v221 = vsel %vm216, %v220, %v211
        %s222 = sld [smem:[#allocation3 + $0x14]]
        %s223 = sld [smem:[#allocation3 + $0x15]]
        %v224 = vstv %s222
        %vm225 = vcmp.ge.f32.partialorder %v154, %v224
        %v226 = vstv %s223
        %v227 = vsel %vm225, %v226, %v221
        %s228 = scalar_lea.vmem %s153, 8 [#allocation7]
        %229 = vst [vmem:[%s228] sm:$0xff] %v227
        %s230 = sand.u32 %s73, 1
        %s231 = scalar_lea.sflag [#allocation6], %s230
        %s232 = sand.u32 %s73, 1
        %s233 = smul.addr %s232, 16
        %s234 = scalar_lea.vmem [#allocation7], %s233
        // Predicated region
        $region29: #{tpu_custom_call.1} parent=23 // pred_check
          %p235 = pneg %p83
        $region30: #{tpu_custom_call.1} parent=23 // pred_check_branch
          %237 = sbr.rel (%p235) target = $region32
        $region31: #{tpu_custom_call.1} parent=23 // pred_region
          %s239 = ssub.s32 256, 256
          %240 = vsyncadd %s231, %s239
          %s241 = smul.addr %s27, 2
          %s242 = sadd.s32 %s28, %s241
          %s243 = smul.addr %s242, 128
          %s244 = scalar_lea.hbm %s2, %s243
          %s245 = sshll.u32 %s234, 4
          %s246 = int_to_ptr.vmem [resolvable:$true] %s245
          %251 = dma.vmem_to_hbm [thread:$0]  %s246, 256, %s244, %s231, 128, 128, 8
        $region32: #{tpu_custom_call.1} parent=23 // pred_fallthru
          _
      $region24: #{tpu_custom_call.1} parent=5 // pred_fallthru
        _
      %p252 = scmp.le.s32.totalorder 2, %s18
      // Predicated region
      $region33: #{tpu_custom_call.1} parent=5 // pred_check
        %p253 = pneg %p252
      $region34: #{tpu_custom_call.1} parent=5 // pred_check_branch
        %255 = sbr.rel (%p253) target = $region36
      $region35: #{tpu_custom_call.1} parent=5 // pred_region
        %s256 = ssub.s32 %s18, 2
        // Predicated region
        $region37: #{tpu_custom_call.1} parent=35 // pred_check
          %p257 = pneg %p89
        $region38: #{tpu_custom_call.1} parent=35 // pred_check_branch
          %259 = sbr.rel (%p257) target = $region40
        $region39: #{tpu_custom_call.1} parent=35 // pred_region
          %s260 = sand.u32 %s74, 1
          %s261 = scalar_lea.sflag [#allocation6], %s260
          %s262 = sand.u32 %s74, 1
          %s263 = smul.addr %s262, 16
          %s264 = scalar_lea.vmem [#allocation7], %s263
          %265 = dma.done %s261, 256
        $region40: #{tpu_custom_call.1} parent=35 // pred_fallthru
          _
      $region36: #{tpu_custom_call.1} parent=5 // pred_fallthru
        _
    $region6: #{tpu_custom_call.1} parent=1 // loop_footer
      %s22 = sadd.s32 1, %s18
    $region7: #{tpu_custom_call.1} parent=1 // loop_footer_branch
      %17 = sbr.rel target = $region3
    $region8: #{tpu_custom_call.1} parent=1 // loop_exit
      _
    %266 = vsyncpa [#allocation5], 1
    %s267 = scalar_lea.sflag [#allocation5], 1
    %268 = vsyncpa %s267, 1
    %269 = vsyncpa [#allocation6], 1
    %s270 = scalar_lea.sflag [#allocation6], 1
    %271 = vsyncpa %s270, 1

</llo_original>
